<compile_context>
chip_gen: v5e
topology: v5e:2x2
jax: 0.10.0
libtpu: 0.0.40
codegen_flags: <defaults>
</compile_context>

<pallas_src>
import functools

import jax
import jax.numpy as jnp
from jax.experimental import pallas as pl
from jax.experimental.pallas import tpu as pltpu

F_NORMALIZE_EPS = 1e-12   # torch.nn.functional.normalize default eps
PAIRDIST_EPS = 1e-6       # torch.nn.PairwiseDistance default eps


def _transe_l2_kernel(h_ref, r_ref, t_ref, o_ref):
    # Refs are (tb, D): batch rows on sublanes, embedding dim on lanes.
    h = h_ref[...]
    r = r_ref[...]
    t = t_ref[...]

    def inv_l2(x):
        # x / max(||x||, eps)  ==  x * rsqrt(max(||x||^2, eps^2))
        sumsq = jnp.sum(x * x, axis=-1, keepdims=True)               # (tb, 1)
        return jax.lax.rsqrt(
            jnp.maximum(sumsq, F_NORMALIZE_EPS * F_NORMALIZE_EPS))

    # Fused normalize + difference; PairwiseDistance(p=2) adds +1e-6 offset.
    d = t * inv_l2(t) - h * inv_l2(h) - r * inv_l2(r) + PAIRDIST_EPS
    o_ref[...] = jnp.sqrt(jnp.sum(d * d, axis=-1, keepdims=True))    # (tb, 1)


def _round_up(x, m):
    return ((x + m - 1) // m) * m


def _vmem_capacity_bytes():
    """Per-generation VMEM capacity; fallback = most restrictive part (v7x)."""
    try:
        info = pltpu.get_tpu_info()
        cap = getattr(info, "vmem_capacity_bytes", None)
        if cap:
            return int(cap)
    except Exception:
        pass
    return 64 * 1024 * 1024   # v7x per-TensorCore physical VMEM


def _choose_tile(B, D, block_b):
    """Pick the batch-tile size and the VMEM limit handed to the compiler."""
    vmem_budget = min(int(0.4 * _vmem_capacity_bytes()), 48 * 1024 * 1024)
    # Bytes of VMEM per batch row: 3 inputs x 2 pipeline buffers, ~4 live
    # (tb, D) temporaries inside the kernel, double-buffered (tb, 1) output;
    # +25% headroom.
    per_row = (3 * 2 + 4) * D * 4 + 2 * 4
    per_row = int(per_row * 1.25) + 1
    max_tb = max(8, (vmem_budget // per_row) // 8 * 8)

    tb = min(_round_up(block_b, 8), _round_up(B, 8), max_tb)
    # v7x has 2 TensorCores: keep >= ~4 grid steps (never below 256 rows/step)
    # when the batch is large enough so the "parallel" axis can be sharded.
    quarter = _round_up(-(-B // 4), 8)
    tb = max(8, min(tb, max(quarter, 256)))
    return tb, vmem_budget


@functools.partial(jax.jit, static_argnums=(3, 4))
def _transe_score_l2_impl(vec_head, vec_rel, vec_tail, tb, vmem_limit):
    B, D = vec_head.shape
    out = pl.pallas_call(
        _transe_l2_kernel,
        out_shape=jax.ShapeDtypeStruct((B, 1), jnp.float32),
        grid_spec=pltpu.PrefetchScalarGridSpec(
            num_scalar_prefetch=0,
            grid=(pl.cdiv(B, tb),),
            in_specs=[
                pl.BlockSpec((tb, D), lambda i: (i, 0)),
                pl.BlockSpec((tb, D), lambda i: (i, 0)),
                pl.BlockSpec((tb, D), lambda i: (i, 0)),
            ],
            out_specs=pl.BlockSpec((tb, 1), lambda i: (i, 0)),
        ),
        compiler_params=pltpu.CompilerParams(
            dimension_semantics=("parallel",),
            vmem_limit_bytes=int(vmem_limit),
        ),
    )(vec_head, vec_rel, vec_tail)
    return out[:, 0]


def transe_score_l2(vec_head, vec_rel, vec_tail, block_b=8192):
    """vec_* : (B, D) arrays. Returns (B,) float32 TransE L2 scores."""
    # TODO(synk): streaming the vectors as bfloat16 (upcast in-kernel) would
    # halve HBM traffic, but is a precision/product decision; kept f32.
    vec_head = jnp.asarray(vec_head, jnp.float32)
    vec_rel = jnp.asarray(vec_rel, jnp.float32)
    vec_tail = jnp.asarray(vec_tail, jnp.float32)
    B, D = vec_head.shape
    tb, vmem_limit = _choose_tile(B, D, block_b)
    return _transe_score_l2_impl(vec_head, vec_rel, vec_tail, tb, vmem_limit)


class TransEPallas:
    """JAX/Pallas port of lightKG TransE (score_func='l2', default branch)."""

    def __init__(self, entity_num, rel_num, embedding_dim, key, block_b=8192):
        self.entity_num = entity_num
        self.rel_num = rel_num
        self.embedding_dimension = embedding_dim
        self.block_b = block_b
        k1, k2 = jax.random.split(key)
        # xavier_normal_: std = sqrt(2 / (fan_in + fan_out))
        std_e = (2.0 / (entity_num + embedding_dim)) ** 0.5
        std_r = (2.0 / (rel_num + embedding_dim)) ** 0.5
        self.entity_embedding = (
            jax.random.normal(k1, (entity_num, embedding_dim), jnp.float32) * std_e
        )
        self.rel_embedding = (
            jax.random.normal(k2, (rel_num, embedding_dim), jnp.float32) * std_r
        )

    def __call__(self, head, rel, tail):
        D = self.embedding_dimension
        # TODO(synk): when the tables fit in a few MiB of VMEM the gather
        # could be fused into the kernel (tables as resident full-block
        # inputs), saving one HBM write+read of the (B, D) vectors; left as
        # XLA gather glue to keep one robust code path for arbitrary table
        # sizes.
        vec_head = jnp.take(self.entity_embedding, head.reshape(-1), axis=0).reshape(-1, D)
        vec_rel = jnp.take(self.rel_embedding, rel.reshape(-1), axis=0).reshape(-1, D)
        vec_tail = jnp.take(self.entity_embedding, tail.reshape(-1), axis=0).reshape(-1, D)
        return transe_score_l2(vec_head, vec_rel, vec_tail, block_b=self.block_b)


def _reference(entity_emb, rel_emb, head, rel, tail):
    """Pure-JAX reference matching torch semantics (sqrt + divide form)."""
    D = entity_emb.shape[1]
    h = jnp.take(entity_emb, head.reshape(-1), axis=0).reshape(-1, D)
    r = jnp.take(rel_emb, rel.reshape(-1), axis=0).reshape(-1, D)
    t = jnp.take(entity_emb, tail.reshape(-1), axis=0).reshape(-1, D)

    def norm(x):
        n = jnp.sqrt(jnp.sum(x * x, axis=-1, keepdims=True))
        return x / jnp.maximum(n, F_NORMALIZE_EPS)

    h, r, t = norm(h), norm(r), norm(t)
    d = (t - h) - r + PAIRDIST_EPS
    return jnp.sqrt(jnp.sum(d * d, axis=-1))


if __name__ == "__main__":
    key = jax.random.PRNGKey(0)
    entity_num, rel_num, embedding_dim = 64, 16, 32
    batch = 8

    model = TransEPallas(entity_num, rel_num, embedding_dim, key)

    k_h, k_r, k_t = jax.random.split(jax.random.PRNGKey(1), 3)
    head = jax.random.randint(k_h, (batch,), 0, entity_num, dtype=jnp.int32)
    rel = jax.random.randint(k_r, (batch,), 0, rel_num, dtype=jnp.int32)
    tail = jax.random.randint(k_t, (batch,), 0, entity_num, dtype=jnp.int32)

    scores = model(head, rel, tail)
    jax.block_until_ready(scores)
    ref = _reference(model.entity_embedding, model.rel_embedding, head, rel, tail)
    assert scores.shape == (batch,)
    assert jnp.allclose(scores, ref, atol=1e-4, rtol=1e-4)

    # Second check: multi-tile grid + ragged last block (B=300, tb=128 -> 3 tiles).
    k2h, k2r, k2t = jax.random.split(jax.random.PRNGKey(2), 3)
    batch2 = 300
    head2 = jax.random.randint(k2h, (batch2,), 0, entity_num, dtype=jnp.int32)
    rel2 = jax.random.randint(k2r, (batch2,), 0, rel_num, dtype=jnp.int32)
    tail2 = jax.random.randint(k2t, (batch2,), 0, entity_num, dtype=jnp.int32)
    vh = jnp.take(model.entity_embedding, head2, axis=0)
    vr = jnp.take(model.rel_embedding, rel2, axis=0)
    vt = jnp.take(model.entity_embedding, tail2, axis=0)
    scores2 = transe_score_l2(vh, vr, vt, block_b=128)
    jax.block_until_ready(scores2)
    ref2 = _reference(model.entity_embedding, model.rel_embedding, head2, rel2, tail2)
    assert scores2.shape == (batch2,)
    assert jnp.allclose(scores2, ref2, atol=1e-4, rtol=1e-4)

    print("KERNEL_OK")
</pallas_src>

<mosaic_0001>
module attributes {stable_mosaic.version = 11 : i64} {
  func.func @_transe_l2_kernel(%arg0: i32, %arg1: memref<8x32xf32, #tpu.memory_space<vmem>>, %arg2: memref<8x32xf32, #tpu.memory_space<vmem>>, %arg3: memref<8x32xf32, #tpu.memory_space<vmem>>, %arg4: memref<8x1xf32, #tpu.memory_space<vmem>>) attributes {dimension_semantics = [#tpu.dimension_semantics<parallel>], iteration_bounds = array<i64: 1>, scalar_prefetch = 0 : i64, scratch_operands = 0 : i64, tpu.core_type = #tpu.core_type<tc>, window_params = [{transform_indices = @transform_0, window_bounds = array<i64: 8, 32>}, {transform_indices = @transform_1, window_bounds = array<i64: 8, 32>}, {transform_indices = @transform_2, window_bounds = array<i64: 8, 32>}, {transform_indices = @transform_3, window_bounds = array<i64: 8, 1>}]} {
    %c0 = arith.constant 0 : index
    %c0_0 = arith.constant 0 : index
    %0 = vector.load %arg1[%c0, %c0_0] : memref<8x32xf32, #tpu.memory_space<vmem>>, vector<8x32xf32>
    %c0_1 = arith.constant 0 : index
    %c0_2 = arith.constant 0 : index
    %1 = vector.load %arg2[%c0_1, %c0_2] : memref<8x32xf32, #tpu.memory_space<vmem>>, vector<8x32xf32>
    %c0_3 = arith.constant 0 : index
    %c0_4 = arith.constant 0 : index
    %2 = vector.load %arg3[%c0_3, %c0_4] : memref<8x32xf32, #tpu.memory_space<vmem>>, vector<8x32xf32>
    %3 = arith.mulf %2, %2 : vector<8x32xf32>
    %cst = arith.constant dense<0.000000e+00> : vector<8xf32>
    %4 = vector.multi_reduction <add>, %3, %cst [1] : vector<8x32xf32> to vector<8xf32>
    %5 = vector.shape_cast %4 : vector<8xf32> to vector<8x1xf32>
    %cst_5 = arith.constant 1.000000e-24 : f32
    %6 = vector.broadcast %cst_5 : f32 to vector<8x1xf32>
    %7 = arith.maximumf %5, %6 : vector<8x1xf32>
    %8 = math.rsqrt %7 : vector<8x1xf32>
    %9 = vector.broadcast %8 : vector<8x1xf32> to vector<8x32xf32>
    %10 = arith.mulf %2, %9 : vector<8x32xf32>
    %11 = arith.mulf %0, %0 : vector<8x32xf32>
    %cst_6 = arith.constant dense<0.000000e+00> : vector<8xf32>
    %12 = vector.multi_reduction <add>, %11, %cst_6 [1] : vector<8x32xf32> to vector<8xf32>
    %13 = vector.shape_cast %12 : vector<8xf32> to vector<8x1xf32>
    %cst_7 = arith.constant 1.000000e-24 : f32
    %14 = vector.broadcast %cst_7 : f32 to vector<8x1xf32>
    %15 = arith.maximumf %13, %14 : vector<8x1xf32>
    %16 = math.rsqrt %15 : vector<8x1xf32>
    %17 = vector.broadcast %16 : vector<8x1xf32> to vector<8x32xf32>
    %18 = arith.mulf %0, %17 : vector<8x32xf32>
    %19 = arith.subf %10, %18 : vector<8x32xf32>
    %20 = arith.mulf %1, %1 : vector<8x32xf32>
    %cst_8 = arith.constant dense<0.000000e+00> : vector<8xf32>
    %21 = vector.multi_reduction <add>, %20, %cst_8 [1] : vector<8x32xf32> to vector<8xf32>
    %22 = vector.shape_cast %21 : vector<8xf32> to vector<8x1xf32>
    %cst_9 = arith.constant 1.000000e-24 : f32
    %23 = vector.broadcast %cst_9 : f32 to vector<8x1xf32>
    %24 = arith.maximumf %22, %23 : vector<8x1xf32>
    %25 = math.rsqrt %24 : vector<8x1xf32>
    %26 = vector.broadcast %25 : vector<8x1xf32> to vector<8x32xf32>
    %27 = arith.mulf %1, %26 : vector<8x32xf32>
    %28 = arith.subf %19, %27 : vector<8x32xf32>
    %cst_10 = arith.constant 9.99999997E-7 : f32
    %29 = vector.broadcast %cst_10 : f32 to vector<8x32xf32>
    %30 = arith.addf %28, %29 : vector<8x32xf32>
    %31 = arith.mulf %30, %30 : vector<8x32xf32>
    %cst_11 = arith.constant dense<0.000000e+00> : vector<8xf32>
    %32 = vector.multi_reduction <add>, %31, %cst_11 [1] : vector<8x32xf32> to vector<8xf32>
    %33 = vector.shape_cast %32 : vector<8xf32> to vector<8x1xf32>
    %34 = math.sqrt %33 : vector<8x1xf32>
    %c0_12 = arith.constant 0 : index
    %c0_13 = arith.constant 0 : index
    %35 = vector.load %arg4[%c0_12, %c0_13] : memref<8x1xf32, #tpu.memory_space<vmem>>, vector<8x1xf32>
    tpu.vector_store %arg4[%c0_12, %c0_13], %34 {strides = array<i32>} : memref<8x1xf32, #tpu.memory_space<vmem>>, vector<8x1xf32>,
    return
  }
  func.func @transform_0(%arg0: i32) -> (i32, i32) {
    %c0_i32 = arith.constant 0 : i32
    %c0_i32_0 = arith.constant 0 : i32
    return %arg0, %c0_i32 : i32, i32
  }
  func.func @transform_1(%arg0: i32) -> (i32, i32) {
    %c0_i32 = arith.constant 0 : i32
    %c0_i32_0 = arith.constant 0 : i32
    return %arg0, %c0_i32 : i32, i32
  }
  func.func @transform_2(%arg0: i32) -> (i32, i32) {
    %c0_i32 = arith.constant 0 : i32
    %c0_i32_0 = arith.constant 0 : i32
    return %arg0, %c0_i32 : i32, i32
  }
  func.func @transform_3(%arg0: i32) -> (i32, i32) {
    %c0_i32 = arith.constant 0 : i32
    %c0_i32_0 = arith.constant 0 : i32
    return %arg0, %c0_i32 : i32, i32
  }
}

</mosaic_0001>

<llo_original>
// kernel: _transe_score_l2_impl.1
$region0: #{_transe_score_l2_impl.1}
  #allocation0 [shape = 'u32[]', space=smem, size = 0x4, offset = 0x4, fixed_abs, tag = 'smem constant byte address 0x4 - core index']
  #allocation1 [shape = 'u32[72,128]{1,0:T(1,128)}', space=vmem, size = 0x9000, scoped, tag = 'internal scratch']
  %s0 = inlined_call_operand.hbm [shape: f32[8,32], index: 0, kind: input, shape index: {}]
  %s1 = inlined_call_operand.hbm [shape: f32[8,32], index: 1, kind: input, shape index: {}]
  %s2 = inlined_call_operand.hbm [shape: f32[8,32], index: 2, kind: input, shape index: {}]
  %s3 = inlined_call_operand.vmem [shape: f32[8,1], index: 3, kind: output, shape index: {}]
  %s4 = sld [smem:[#allocation0]]
  $region34: #{_transe_score_l2_impl.1} parent=0
    _
  %s6 = ssub.s32 1, %s4
  %s7 = scalar_select 0, %s6, %s4
  $region1: #{_transe_score_l2_impl.1} parent=0
    #allocation2 [shape = 'u8[4096]{0}', space=vmem, size = 0x1000, scoped, tag = 'input window, operand 0, single buffered']
    #allocation3 [shape = 's32[1]{0}', space=sflag, size = 0x4, scoped, tag = 'scoped memory for _transe_score_l2_impl.1']
    #allocation4 [shape = 'u8[4096]{0}', space=vmem, size = 0x1000, scoped, tag = 'input window, operand 1, single buffered']
    #allocation5 [shape = 's32[1]{0}', space=sflag, size = 0x4, scoped, tag = 'scoped memory for _transe_score_l2_impl.1']
    #allocation6 [shape = 'u8[4096]{0}', space=vmem, size = 0x1000, scoped, tag = 'input window, operand 2, single buffered']
    %8 = vsyncpa [#allocation3], 0
    %9 = vsyncpa [#allocation5], 0
    // Predicated region
    $region2: #{_transe_score_l2_impl.1} parent=1 // pred_check
      _
    $region3: #{_transe_score_l2_impl.1} parent=1 // pred_check_branch
      %11 = sbr.rel (0) target = $region5
    $region4: #{_transe_score_l2_impl.1} parent=1 // pred_region
      %13 = vsyncadd [#allocation3], 0
      %s15 = sshll.u32 %s0, 4
      %s16 = int_to_ptr.hbm [resolvable:$true] %s15
      %s17 = sshll.u32 [#allocation2], 4
      %s18 = int_to_ptr.vmem [resolvable:$true] %s17
      %20 = dma.hbm_to_vmem [thread:$0]  %s16, 128, %s18, [#allocation3]
    $region5: #{_transe_score_l2_impl.1} parent=1 // pred_fallthru
      _
    // Predicated region
    $region6: #{_transe_score_l2_impl.1} parent=1 // pred_check
      _
    $region7: #{_transe_score_l2_impl.1} parent=1 // pred_check_branch
      %22 = sbr.rel (0) target = $region9
    $region8: #{_transe_score_l2_impl.1} parent=1 // pred_region
      %24 = vsyncadd [#allocation5], 0
      %s26 = sshll.u32 %s1, 4
      %s27 = int_to_ptr.hbm [resolvable:$true] %s26
      %s28 = sshll.u32 [#allocation4], 4
      %s29 = int_to_ptr.vmem [resolvable:$true] %s28
      %31 = dma.hbm_to_vmem [thread:$0]  %s27, 128, %s29, [#allocation5]
    $region9: #{_transe_score_l2_impl.1} parent=1 // pred_fallthru
      _
    // Predicated region
    $region10: #{_transe_score_l2_impl.1} parent=1 // pred_check
      _
    $region11: #{_transe_score_l2_impl.1} parent=1 // pred_check_branch
      %33 = sbr.rel (0) target = $region13
    $region12: #{_transe_score_l2_impl.1} parent=1 // pred_region
      %35 = vsyncadd [#allocation5], 0
      %s37 = sshll.u32 %s2, 4
      %s38 = int_to_ptr.hbm [resolvable:$true] %s37
      %s39 = sshll.u32 [#allocation6], 4
      %s40 = int_to_ptr.vmem [resolvable:$true] %s39
      %42 = dma.hbm_to_vmem [thread:$0]  %s38, 128, %s40, [#allocation5]
    $region13: #{_transe_score_l2_impl.1} parent=1 // pred_fallthru
      _
    // Predicated region
    $region14: #{_transe_score_l2_impl.1} parent=1 // pred_check
      _
    $region15: #{_transe_score_l2_impl.1} parent=1 // pred_check_branch
      %44 = sbr.rel (0) target = $region17
    $region16: #{_transe_score_l2_impl.1} parent=1 // pred_region
      %46 = dma.done [#allocation3], 128
    $region17: #{_transe_score_l2_impl.1} parent=1 // pred_fallthru
      _
    // Predicated region
    $region18: #{_transe_score_l2_impl.1} parent=1 // pred_check
      _
    $region19: #{_transe_score_l2_impl.1} parent=1 // pred_check_branch
      %48 = sbr.rel (0) target = $region21
    $region20: #{_transe_score_l2_impl.1} parent=1 // pred_region
      %50 = dma.done [#allocation5], 128
    $region21: #{_transe_score_l2_impl.1} parent=1 // pred_fallthru
      _
    // Predicated region
    $region22: #{_transe_score_l2_impl.1} parent=1 // pred_check
      _
    $region23: #{_transe_score_l2_impl.1} parent=1 // pred_check_branch
      %52 = sbr.rel (0) target = $region25
    $region24: #{_transe_score_l2_impl.1} parent=1 // pred_region
      %54 = dma.done [#allocation5], 128
    $region25: #{_transe_score_l2_impl.1} parent=1 // pred_fallthru
      _
    %v55 = vld [vmem:[#allocation2] sm:$0xff]
    %v56 = vld [vmem:[#allocation4] sm:$0xff]
    %v57 = vld [vmem:[#allocation6] sm:$0xff]
    %v58 = vmul.f32 %v57, %v57
    %vm59 = vcmask 261120
    %v60 = vsel %vm59, %v58, 0.0
    %61 = vadd.xlane.f32.xlu0 %v60
    %v62 = vpop.xlane.xlu0 %61
    %v63 = vmax.f32 %v62, 1e-24
    %v64 = vrsqrt.pop %v63
    %v65 = vmul.f32 %v64, %v63
    %v66 = vmul.f32 %v65, %v64
    %v67 = vmul.f32 0.5, %v66
    %v68 = vsub.f32 1.5, %v67
    %v69 = vmul.f32 %v64, %v68
    %vm70 = vweird.f32 %v63
    %vm71 = vweird.f32 %v64
    %vm72 = vmor %vm70, %vm71
    %v73 = vsel %vm72, %v64, %v69
    %v74 = vmul.f32 %v57, %v73
    %v75 = vmul.f32 %v55, %v55
    %v76 = vsel %vm59, %v75, 0.0
    %77 = vadd.xlane.f32.xlu0 %v76
    %v78 = vpop.xlane.xlu0 %77
    %v79 = vmax.f32 %v78, 1e-24
    %v80 = vrsqrt.pop %v79
    %v81 = vmul.f32 %v80, %v79
    %v82 = vmul.f32 %v81, %v80
    %v83 = vmul.f32 0.5, %v82
    %v84 = vsub.f32 1.5, %v83
    %v85 = vmul.f32 %v80, %v84
    %vm86 = vweird.f32 %v79
    %vm87 = vweird.f32 %v80
    %vm88 = vmor %vm86, %vm87
    %v89 = vsel %vm88, %v80, %v85
    %v90 = vmul.f32 %v55, %v89
    %v91 = vsub.f32 %v74, %v90
    %v92 = vmul.f32 %v56, %v56
    %v93 = vsel %vm59, %v92, 0.0
    %94 = vadd.xlane.f32.xlu0 %v93
    %v95 = vpop.xlane.xlu0 %94
    %v96 = vmax.f32 %v95, 1e-24
    %v97 = vrsqrt.pop %v96
    %v98 = vmul.f32 %v97, %v96
    %v99 = vmul.f32 %v98, %v97
    %v100 = vmul.f32 0.5, %v99
    %v101 = vsub.f32 1.5, %v100
    %v102 = vmul.f32 %v97, %v101
    %vm103 = vweird.f32 %v96
    %vm104 = vweird.f32 %v97
    %vm105 = vmor %vm103, %vm104
    %v106 = vsel %vm105, %v97, %v102
    %v107 = vmul.f32 %v56, %v106
    %v108 = vsub.f32 %v91, %v107
    %v109 = vadd.f32 %v108, 1e-06
    %v110 = vmul.f32 %v109, %v109
    %v111 = vsel %vm59, %v110, 0.0
    %112 = vadd.xlane.f32.xlu0 %v111
    %v113 = vpop.xlane.xlu0 %112
    %v114 = vrsqrt.pop %v113
    %v115 = vmul.f32 %v114, %v113
    %v116 = vmul.f32 %v115, %v114
    %v117 = vmul.f32 0.5, %v116
    %v118 = vsub.f32 1.5, %v117
    %v119 = vmul.f32 %v114, %v118
    %v120 = vmul.f32 %v113, %v119
    %vm121 = vcmp.eq.f32.partialorder %v113, inf
    %v122 = vsel %vm121, %v113, %v120
    %vm123 = vcmp.eq.f32.partialorder %v113, 0.0
    %v124 = vand.u32 %v113, 2147483648
    %v125 = vsel %vm123, %v124, %v122
    %vm126 = vcmask 7168
    %127 = vst.msk [vmem:[%s3] sm:$0xff] %vm126, %v125
    // Predicated region
    $region26: #{_transe_score_l2_impl.1} parent=1 // pred_check
      _
    $region27: #{_transe_score_l2_impl.1} parent=1 // pred_check_branch
      %129 = sbr.rel (0) target = $region29
    $region28: #{_transe_score_l2_impl.1} parent=1 // pred_region
      _
    $region29: #{_transe_score_l2_impl.1} parent=1 // pred_fallthru
      _
    // Predicated region
    $region30: #{_transe_score_l2_impl.1} parent=1 // pred_check
      _
    $region31: #{_transe_score_l2_impl.1} parent=1 // pred_check_branch
      %131 = sbr.rel (0) target = $region33
    $region32: #{_transe_score_l2_impl.1} parent=1 // pred_region
      _
    $region33: #{_transe_score_l2_impl.1} parent=1 // pred_fallthru
      _
    %132 = vsyncpa [#allocation3], 1
    %133 = vsyncpa [#allocation5], 1

</llo_original>
